<compile_context>
chip_gen: v7x
topology: tpu7x:2x2x1
jax: 0.10.0
libtpu: 0.0.40
codegen_flags: <defaults>
</compile_context>

<pallas_src>
import math

import jax
import jax.numpy as jnp
from jax import lax
from jax.experimental import pallas as pl
from jax.experimental.pallas import tpu as pltpu

LAYER_NORM_EPS = 1e-12
_LANE = 128


def _round_up(x, m):
    return (x + m - 1) // m * m


def _gelu_erf(x):
    # x * 0.5 * (1 + erf(x / sqrt(2)))  -- matches the torch reference `gelu`
    return x * 0.5 * (1.0 + lax.erf(x * jnp.float32(1.0 / math.sqrt(2.0))))


def _usable_vmem_bytes():
    """Physical VMEM minus ~1/8 headroom for compiler-internal scratch."""
    try:
        cap = int(pltpu.get_tpu_info().vmem_capacity_bytes)
    except Exception:
        cap = 64 << 20  # conservative fallback (v7x-sized per-core VMEM)
    return cap - max(8 << 20, cap // 8)


def _lm_vmem_footprint(tm, tv, H, out_bytes):
    return (2 * tm * H * 4            # x tiles (f32, double-buffered)
            + H * H * 2               # transform W (bf16, single-buffered)
            + 3 * H * 4               # transform b / gamma / beta (single-buf)
            + 2 * H * tv * 2          # decoder W tiles (bf16, double-buffered)
            + 2 * tv * 4              # decoder bias tiles (f32)
            + 2 * tm * tv * out_bytes # output tiles
            + tm * H * 2)             # h scratch (bf16)


def _const_spec(shape):
    """BlockSpec for an operand whose block index never changes: single-buffer."""
    idx = lambda i, j: (0, 0)
    try:
        return pl.BlockSpec(shape, idx, pipeline_mode=pl.Buffered(1))
    except TypeError:  # older jax without pipeline_mode support
        return pl.BlockSpec(shape, idx)


# --------------------------------------------------------------------------
# Kernels
# --------------------------------------------------------------------------
def lm_head_kernel(x_ref, w1_ref, b1_ref, gamma_ref, beta_ref,
                   wd_ref, bdec_ref, out_ref, h_scratch):
    """One (token-tile, vocab-tile) grid step of the LM prediction head."""
    j = pl.program_id(1)

    @pl.when(j == 0)
    def _():
        # transform: dense -> gelu -> LayerNorm, computed once per token tile.
        xb = x_ref[...].astype(jnp.bfloat16)           # cast in-kernel (no host pass)
        h = jnp.dot(xb, w1_ref[...],
                    preferred_element_type=jnp.float32) + b1_ref[...]
        h = _gelu_erf(h)
        mu = jnp.mean(h, axis=-1, keepdims=True)
        var = jnp.mean((h - mu) ** 2, axis=-1, keepdims=True)
        h = (h - mu) * lax.rsqrt(var + LAYER_NORM_EPS)
        h = h * gamma_ref[...] + beta_ref[...]
        h_scratch[...] = h.astype(h_scratch.dtype)

    # decoder vocab tile: [tm, H] @ [H, tv] + bias[tv]
    logits = jnp.dot(h_scratch[...], wd_ref[...],
                     preferred_element_type=jnp.float32) + bdec_ref[...]
    out_ref[...] = logits.astype(out_ref.dtype)


def nsp_kernel(p_ref, w_ref, b_ref, out_ref):
    """seq_relationship head: Linear(H, 2), output lane-padded to 128."""
    out = jnp.dot(p_ref[...], w_ref[...],
                  preferred_element_type=jnp.float32) + b_ref[...]
    out_ref[...] = out.astype(out_ref.dtype)


# --------------------------------------------------------------------------
# Parameter preparation (one-time, hoisted out of the per-call hot path)
# --------------------------------------------------------------------------
def prepare_params(params, *, vocab_tile=None):
    """Casts / pads the large decoder weight (and tiny NSP weight) once so the
    per-call hot path never re-streams them through HBM."""
    H, V = params["decoder_w"].shape
    usable = _usable_vmem_bytes()
    if vocab_tile is None:
        vocab_tile = 2048 if usable >= (96 << 20) else 1024
    tv = min(vocab_tile, _round_up(V, _LANE))
    v_pad = _round_up(V, tv)

    wd = params["decoder_w"].astype(jnp.bfloat16)
    bdec = params["decoder_bias"].astype(jnp.float32)
    if v_pad != V:
        wd = jnp.pad(wd, ((0, 0), (0, v_pad - V)))
        bdec = jnp.pad(bdec, ((0, 0), (0, v_pad - V)))

    nsp_w = jnp.pad(params["nsp_w"].astype(jnp.float32), ((0, 0), (0, _LANE - 2)))
    nsp_b = jnp.pad(params["nsp_b"].astype(jnp.float32), ((0, 0), (0, _LANE - 2)))

    return {
        "_prepared": True,
        "H": H, "V": V, "tv": tv, "v_pad": v_pad,
        "transform_w": params["transform_w"].astype(jnp.bfloat16),
        "transform_b": params["transform_b"].astype(jnp.float32),
        "ln_gamma": params["ln_gamma"].astype(jnp.float32),
        "ln_beta": params["ln_beta"].astype(jnp.float32),
        "decoder_w": wd,
        "decoder_bias": bdec,
        "nsp_w": nsp_w,
        "nsp_b": nsp_b,
    }


# --------------------------------------------------------------------------
# Forward pass
# --------------------------------------------------------------------------
def bert_pretraining_heads(sequence_output, pooled_output, params,
                           *, token_tile=None, logits_dtype=jnp.float32):
    if not isinstance(params, dict) or not params.get("_prepared", False):
        params = prepare_params(params)

    B, S, H = sequence_output.shape
    assert H == params["H"]
    V, v_pad, tv = params["V"], params["v_pad"], params["tv"]
    n_tok = B * S

    usable = _usable_vmem_bytes()
    out_bytes = jnp.dtype(logits_dtype).itemsize

    # ---- token tile selection -------------------------------------------
    if token_tile is None:
        token_tile = 1024
    tm = min(token_tile, _round_up(n_tok, 16))          # 16: bf16 sublane packing
    # On 64-MiB-VMEM chips (v7x: 2 TensorCores/chip) ensure >=2 token tiles so
    # both cores get work on the "parallel" axis.
    if usable <= (60 << 20):
        tm = min(tm, max(16, _round_up((n_tok + 1) // 2, 16)))
    # Shrink tm until the double-buffered tile footprint fits usable VMEM.
    while tm > 16 and _lm_vmem_footprint(tm, tv, H, out_bytes) + (4 << 20) > usable:
        tm = max(16, tm // 2)
    n_pad = _round_up(n_tok, tm)

    # ---- LM-head operand: f32 tokens, cast to bf16 inside the kernel -----
    x = sequence_output.reshape(n_tok, H).astype(jnp.float32)
    if n_pad != n_tok:
        x = jnp.pad(x, ((0, n_pad - n_tok), (0, 0)))

    grid = (n_pad // tm, v_pad // tv)
    footprint = _lm_vmem_footprint(tm, tv, H, out_bytes)
    vmem_limit = int(max(min(usable, footprint + (8 << 20)), 1 << 20))

    prediction_scores = pl.pallas_call(
        lm_head_kernel,
        out_shape=jax.ShapeDtypeStruct((n_pad, v_pad), logits_dtype),
        grid_spec=pltpu.PrefetchScalarGridSpec(
            num_scalar_prefetch=0,
            grid=grid,
            in_specs=[
                pl.BlockSpec((tm, H), lambda i, j: (i, 0)),   # token tile (f32)
                _const_spec((H, H)),                          # transform W (bf16)
                _const_spec((1, H)),                          # transform b
                _const_spec((1, H)),                          # LN gamma
                _const_spec((1, H)),                          # LN beta
                pl.BlockSpec((H, tv), lambda i, j: (0, j)),   # decoder W tile
                pl.BlockSpec((1, tv), lambda i, j: (0, j)),   # decoder bias tile
            ],
            out_specs=pl.BlockSpec((tm, tv), lambda i, j: (i, j)),
            scratch_shapes=[pltpu.VMEM((tm, H), jnp.bfloat16)],
        ),
        compiler_params=pltpu.CompilerParams(
            dimension_semantics=("parallel", "arbitrary"),
            vmem_limit_bytes=vmem_limit,
        ),
    )(x, params["transform_w"], params["transform_b"],
      params["ln_gamma"], params["ln_beta"],
      params["decoder_w"], params["decoder_bias"])
    prediction_scores = prediction_scores[:n_tok, :V].reshape(B, S, V)

    # ---- NSP head: tiny matmul, lane-padded weights prepared once --------
    # TODO(synk): reviewer suggested folding this into plain XLA; kept as a
    # Pallas kernel (negligible cost) so the full module forward stays in Pallas.
    nsp_padded = pl.pallas_call(
        nsp_kernel,
        out_shape=jax.ShapeDtypeStruct((B, _LANE), jnp.float32),
        in_specs=[
            pl.BlockSpec((B, H), lambda: (0, 0)),
            pl.BlockSpec((H, _LANE), lambda: (0, 0)),
            pl.BlockSpec((1, _LANE), lambda: (0, 0)),
        ],
        out_specs=pl.BlockSpec((B, _LANE), lambda: (0, 0)),
        grid=(),
    )(pooled_output.astype(jnp.float32), params["nsp_w"], params["nsp_b"])
    seq_relationship_score = nsp_padded[:, :2]

    return prediction_scores, seq_relationship_score


# --------------------------------------------------------------------------
# Params / reference / test
# --------------------------------------------------------------------------
def init_params(key, hidden_size, vocab_size):
    ks = jax.random.split(key, 8)
    scale = 0.02
    return {
        # Linear weights stored pre-transposed as [in, out] (x @ W + b).
        "transform_w": scale * jax.random.normal(ks[0], (hidden_size, hidden_size), jnp.float32),
        "transform_b": scale * jax.random.normal(ks[1], (1, hidden_size), jnp.float32),
        "ln_gamma": jnp.ones((1, hidden_size), jnp.float32),
        "ln_beta": jnp.zeros((1, hidden_size), jnp.float32),
        "decoder_w": scale * jax.random.normal(ks[2], (hidden_size, vocab_size), jnp.float32),
        "decoder_bias": jnp.zeros((1, vocab_size), jnp.float32),  # nn.Parameter(zeros(V))
        "nsp_w": scale * jax.random.normal(ks[3], (hidden_size, 2), jnp.float32),
        "nsp_b": scale * jax.random.normal(ks[4], (1, 2), jnp.float32),
    }


def reference(sequence_output, pooled_output, params):
    # Pure-JAX reference mirroring the kernel's bf16-in / f32-accumulate math.
    x = sequence_output.astype(jnp.bfloat16)
    w1 = params["transform_w"].astype(jnp.bfloat16)
    h = jnp.dot(x, w1, preferred_element_type=jnp.float32) + params["transform_b"][0]
    h = _gelu_erf(h)
    mu = jnp.mean(h, axis=-1, keepdims=True)
    var = jnp.mean((h - mu) ** 2, axis=-1, keepdims=True)
    h = (h - mu) * lax.rsqrt(var + LAYER_NORM_EPS)
    h = h * params["ln_gamma"][0] + params["ln_beta"][0]
    wd = params["decoder_w"].astype(jnp.bfloat16)
    scores = jnp.dot(h.astype(jnp.bfloat16), wd,
                     preferred_element_type=jnp.float32) + params["decoder_bias"][0]
    nsp = pooled_output @ params["nsp_w"] + params["nsp_b"][0]
    return scores, nsp


if __name__ == "__main__":
    B, S, H, V = 2, 8, 32, 128
    key = jax.random.PRNGKey(0)
    k_seq, k_pool, k_par = jax.random.split(key, 3)
    sequence_output = jax.random.normal(k_seq, (B, S, H), jnp.float32)
    pooled_output = jax.random.normal(k_pool, (B, H), jnp.float32)
    params = init_params(k_par, H, V)

    prepared = prepare_params(params)          # one-time cast/pad, out of hot path
    pred, nsp = bert_pretraining_heads(sequence_output, pooled_output, prepared)
    pred, nsp = jax.block_until_ready((pred, nsp))

    pred_ref, nsp_ref = reference(sequence_output, pooled_output, params)
    assert pred.shape == (B, S, V) and nsp.shape == (B, 2)
    assert jnp.allclose(pred, pred_ref, atol=2e-2, rtol=2e-2), \
        float(jnp.max(jnp.abs(pred - pred_ref)))
    assert jnp.allclose(nsp, nsp_ref, atol=1e-4, rtol=1e-4)
    print("KERNEL_OK")
</pallas_src>

<mosaic_0001>
module attributes {stable_mosaic.version = 11 : i64} {
  func.func @lm_head_kernel(%arg0: i32, %arg1: i32, %arg2: memref<16x32xf32, #tpu.memory_space<vmem>>, %arg3: memref<32x32xbf16, #tpu.memory_space<vmem>>, %arg4: memref<1x32xf32, #tpu.memory_space<vmem>>, %arg5: memref<1x32xf32, #tpu.memory_space<vmem>>, %arg6: memref<1x32xf32, #tpu.memory_space<vmem>>, %arg7: memref<32x128xbf16, #tpu.memory_space<vmem>>, %arg8: memref<1x128xf32, #tpu.memory_space<vmem>>, %arg9: memref<16x128xf32, #tpu.memory_space<vmem>>, %arg10: memref<16x32xbf16, #tpu.memory_space<vmem>>) attributes {dimension_semantics = [#tpu.dimension_semantics<parallel>, #tpu.dimension_semantics<arbitrary>], iteration_bounds = array<i64: 1, 1>, scalar_prefetch = 0 : i64, scratch_operands = 1 : i64, tpu.core_type = #tpu.core_type<tc>, window_params = [{transform_indices = @transform_0, window_bounds = array<i64: 16, 32>}, {pipeline_mode = #tpu.pipeline_mode<synchronous>, transform_indices = @transform_1, window_bounds = array<i64: 32, 32>}, {pipeline_mode = #tpu.pipeline_mode<synchronous>, transform_indices = @transform_2, window_bounds = array<i64: 1, 32>}, {pipeline_mode = #tpu.pipeline_mode<synchronous>, transform_indices = @transform_3, window_bounds = array<i64: 1, 32>}, {pipeline_mode = #tpu.pipeline_mode<synchronous>, transform_indices = @transform_4, window_bounds = array<i64: 1, 32>}, {transform_indices = @transform_5, window_bounds = array<i64: 32, 128>}, {transform_indices = @transform_6, window_bounds = array<i64: 1, 128>}, {transform_indices = @transform_7, window_bounds = array<i64: 16, 128>}]} {
    %c0_i32 = arith.constant 0 : i32
    %0 = arith.cmpi eq, %arg1, %c0_i32 : i32
    %1 = arith.extui %0 : i1 to i32
    %c0_i32_0 = arith.constant 0 : i32
    %2 = arith.cmpi ne, %1, %c0_i32_0 : i32
    scf.if %2 {
      %c0_8 = arith.constant 0 : index
      %c0_9 = arith.constant 0 : index
      %10 = vector.load %arg2[%c0_8, %c0_9] : memref<16x32xf32, #tpu.memory_space<vmem>>, vector<16x32xf32>
      %11 = arith.truncf %10 : vector<16x32xf32> to vector<16x32xbf16>
      %c0_10 = arith.constant 0 : index
      %c0_11 = arith.constant 0 : index
      %12 = vector.load %arg3[%c0_10, %c0_11] : memref<32x32xbf16, #tpu.memory_space<vmem>>, vector<32x32xbf16>
      %cst_12 = arith.constant dense<0.000000e+00> : vector<16x32xf32>
      %13 = tpu.matmul %11, %12, %cst_12 {dimension_numbers = #tpu.dot_dimension_numbers<[1], [0], [0], [1], [0, 0, 1, 1], [], []>} : vector<16x32xbf16>, vector<32x32xbf16>, vector<16x32xf32> -> vector<16x32xf32>
      %c0_13 = arith.constant 0 : index
      %c0_14 = arith.constant 0 : index
      %14 = vector.load %arg4[%c0_13, %c0_14] : memref<1x32xf32, #tpu.memory_space<vmem>>, vector<1x32xf32>
      %15 = vector.broadcast %14 : vector<1x32xf32> to vector<16x32xf32>
      %16 = arith.addf %13, %15 : vector<16x32xf32>
      %cst_15 = arith.constant 5.000000e-01 : f32
      %17 = vector.broadcast %cst_15 : f32 to vector<16x32xf32>
      %18 = arith.mulf %16, %17 : vector<16x32xf32>
      %cst_16 = arith.constant 0.707106769 : f32
      %19 = vector.broadcast %cst_16 : f32 to vector<16x32xf32>
      %20 = arith.mulf %16, %19 : vector<16x32xf32>
      %21 = math.erf %20 : vector<16x32xf32>
      %cst_17 = arith.constant 1.000000e+00 : f32
      %22 = vector.broadcast %cst_17 : f32 to vector<16x32xf32>
      %23 = arith.addf %22, %21 : vector<16x32xf32>
      %24 = arith.mulf %18, %23 : vector<16x32xf32>
      %cst_18 = arith.constant dense<0.000000e+00> : vector<16xf32>
      %25 = vector.multi_reduction <add>, %24, %cst_18 [1] : vector<16x32xf32> to vector<16xf32>
      %26 = vector.shape_cast %25 : vector<16xf32> to vector<16x1xf32>
      %cst_19 = arith.constant 3.200000e+01 : f32
      %27 = vector.broadcast %cst_19 : f32 to vector<16x1xf32>
      %28 = arith.divf %26, %27 : vector<16x1xf32>
      %29 = vector.broadcast %28 : vector<16x1xf32> to vector<16x32xf32>
      %30 = arith.subf %24, %29 : vector<16x32xf32>
      %31 = arith.mulf %30, %30 : vector<16x32xf32>
      %cst_20 = arith.constant dense<0.000000e+00> : vector<16xf32>
      %32 = vector.multi_reduction <add>, %31, %cst_20 [1] : vector<16x32xf32> to vector<16xf32>
      %33 = vector.shape_cast %32 : vector<16xf32> to vector<16x1xf32>
      %cst_21 = arith.constant 3.200000e+01 : f32
      %34 = vector.broadcast %cst_21 : f32 to vector<16x1xf32>
      %35 = arith.divf %33, %34 : vector<16x1xf32>
      %36 = vector.broadcast %28 : vector<16x1xf32> to vector<16x32xf32>
      %37 = arith.subf %24, %36 : vector<16x32xf32>
      %cst_22 = arith.constant 9.99999996E-13 : f32
      %38 = vector.broadcast %cst_22 : f32 to vector<16x1xf32>
      %39 = arith.addf %35, %38 : vector<16x1xf32>
      %40 = math.rsqrt %39 : vector<16x1xf32>
      %41 = vector.broadcast %40 : vector<16x1xf32> to vector<16x32xf32>
      %42 = arith.mulf %37, %41 : vector<16x32xf32>
      %c0_23 = arith.constant 0 : index
      %c0_24 = arith.constant 0 : index
      %43 = vector.load %arg5[%c0_23, %c0_24] : memref<1x32xf32, #tpu.memory_space<vmem>>, vector<1x32xf32>
      %44 = vector.broadcast %43 : vector<1x32xf32> to vector<16x32xf32>
      %45 = arith.mulf %42, %44 : vector<16x32xf32>
      %c0_25 = arith.constant 0 : index
      %c0_26 = arith.constant 0 : index
      %46 = vector.load %arg6[%c0_25, %c0_26] : memref<1x32xf32, #tpu.memory_space<vmem>>, vector<1x32xf32>
      %47 = vector.broadcast %46 : vector<1x32xf32> to vector<16x32xf32>
      %48 = arith.addf %45, %47 : vector<16x32xf32>
      %49 = arith.truncf %48 : vector<16x32xf32> to vector<16x32xbf16>
      %c0_27 = arith.constant 0 : index
      %c0_28 = arith.constant 0 : index
      %50 = vector.load %arg10[%c0_27, %c0_28] : memref<16x32xbf16, #tpu.memory_space<vmem>>, vector<16x32xbf16>
      tpu.vector_store %arg10[%c0_27, %c0_28], %49 {strides = array<i32>} : memref<16x32xbf16, #tpu.memory_space<vmem>>, vector<16x32xbf16>,
    } else {
    }
    %c0 = arith.constant 0 : index
    %c0_1 = arith.constant 0 : index
    %3 = vector.load %arg10[%c0, %c0_1] : memref<16x32xbf16, #tpu.memory_space<vmem>>, vector<16x32xbf16>
    %c0_2 = arith.constant 0 : index
    %c0_3 = arith.constant 0 : index
    %4 = vector.load %arg7[%c0_2, %c0_3] : memref<32x128xbf16, #tpu.memory_space<vmem>>, vector<32x128xbf16>
    %cst = arith.constant dense<0.000000e+00> : vector<16x128xf32>
    %5 = tpu.matmul %3, %4, %cst {dimension_numbers = #tpu.dot_dimension_numbers<[1], [0], [0], [1], [0, 0, 1, 1], [], []>} : vector<16x32xbf16>, vector<32x128xbf16>, vector<16x128xf32> -> vector<16x128xf32>
    %c0_4 = arith.constant 0 : index
    %c0_5 = arith.constant 0 : index
    %6 = vector.load %arg8[%c0_4, %c0_5] : memref<1x128xf32, #tpu.memory_space<vmem>>, vector<1x128xf32>
    %7 = vector.broadcast %6 : vector<1x128xf32> to vector<16x128xf32>
    %8 = arith.addf %5, %7 : vector<16x128xf32>
    %c0_6 = arith.constant 0 : index
    %c0_7 = arith.constant 0 : index
    %9 = vector.load %arg9[%c0_6, %c0_7] : memref<16x128xf32, #tpu.memory_space<vmem>>, vector<16x128xf32>
    tpu.vector_store %arg9[%c0_6, %c0_7], %8 {strides = array<i32>} : memref<16x128xf32, #tpu.memory_space<vmem>>, vector<16x128xf32>,
    return
  }
  func.func @transform_0(%arg0: i32, %arg1: i32) -> (i32, i32) {
    %c0_i32 = arith.constant 0 : i32
    %c0_i32_0 = arith.constant 0 : i32
    return %arg0, %c0_i32 : i32, i32
  }
  func.func @transform_1(%arg0: i32, %arg1: i32) -> (i32, i32) {
    %c0_i32 = arith.constant 0 : i32
    %c0_i32_0 = arith.constant 0 : i32
    %c0_i32_1 = arith.constant 0 : i32
    return %c0_i32, %c0_i32_0 : i32, i32
  }
  func.func @transform_2(%arg0: i32, %arg1: i32) -> (i32, i32) {
    %c0_i32 = arith.constant 0 : i32
    %c0_i32_0 = arith.constant 0 : i32
    %c0_i32_1 = arith.constant 0 : i32
    return %c0_i32, %c0_i32_0 : i32, i32
  }
  func.func @transform_3(%arg0: i32, %arg1: i32) -> (i32, i32) {
    %c0_i32 = arith.constant 0 : i32
    %c0_i32_0 = arith.constant 0 : i32
    %c0_i32_1 = arith.constant 0 : i32
    return %c0_i32, %c0_i32_0 : i32, i32
  }
  func.func @transform_4(%arg0: i32, %arg1: i32) -> (i32, i32) {
    %c0_i32 = arith.constant 0 : i32
    %c0_i32_0 = arith.constant 0 : i32
    %c0_i32_1 = arith.constant 0 : i32
    return %c0_i32, %c0_i32_0 : i32, i32
  }
  func.func @transform_5(%arg0: i32, %arg1: i32) -> (i32, i32) {
    %c0_i32 = arith.constant 0 : i32
    %c0_i32_0 = arith.constant 0 : i32
    return %c0_i32, %arg1 : i32, i32
  }
  func.func @transform_6(%arg0: i32, %arg1: i32) -> (i32, i32) {
    %c0_i32 = arith.constant 0 : i32
    %c0_i32_0 = arith.constant 0 : i32
    return %c0_i32, %arg1 : i32, i32
  }
  func.func @transform_7(%arg0: i32, %arg1: i32) -> (i32, i32) {
    %c0_i32 = arith.constant 0 : i32
    return %arg0, %arg1 : i32, i32
  }
}

</mosaic_0001>

<llo_original>
// kernel: tpu_custom_call.1
$region0: #{tpu_custom_call.1}
  #allocation0 [shape = 'u32[]', space=smem, size = 0x4, offset = 0x4, fixed_abs, tag = 'smem constant byte address 0x4 - core index']
  #allocation1 [shape = 'u32[144,128]{1,0:T(1,128)}', space=vmem, size = 0x12000, scoped, tag = 'internal scratch']
  #allocation2 [shape = 'bf16[16,32]{1,0:T(16,128)(2,1)}', space=vmem, size = 0x1000, scoped, tag = 'scratch operand']
  %s0 = inlined_call_operand.hbm [shape: f32[16,32], index: 0, kind: input, shape index: {}]
  %s1 = inlined_call_operand.hbm [shape: bf16[32,32], index: 1, kind: input, shape index: {}]
  %s2 = inlined_call_operand.vmem [shape: f32[1,32], index: 2, kind: input, shape index: {}]
  %s3 = inlined_call_operand.vmem [shape: f32[1,32], index: 3, kind: input, shape index: {}]
  %s4 = inlined_call_operand.hbm [shape: f32[1,32], index: 4, kind: input, shape index: {}]
  %s5 = inlined_call_operand.vmem [shape: bf16[32,128], index: 5, kind: input, shape index: {}]
  %s6 = inlined_call_operand.vmem [shape: f32[1,128], index: 6, kind: input, shape index: {}]
  %s7 = inlined_call_operand.hbm [shape: f32[16,128], index: 7, kind: output, shape index: {}]
  %s8 = sld [smem:[#allocation0]]
  $region54: #{tpu_custom_call.1} parent=0
    _
  %s10 = ssub.s32 1, %s8
  %s11 = scalar_select 0, %s10, %s8
  $region1: #{tpu_custom_call.1} parent=0
    #allocation3 [shape = 'u8[8192]{0}', space=vmem, size = 0x2000, scoped, tag = 'input window, operand 0, single buffered']
    #allocation4 [shape = 's32[1]{0}', space=sflag, size = 0x4, scoped, tag = 'scoped memory for tpu_custom_call.1']
    #allocation5 [shape = 's32[1]{0}', space=sflag, size = 0x4, scoped, tag = 'scoped memory for tpu_custom_call.1']
    #allocation6 [shape = 'u8[8192]{0}', space=vmem, size = 0x2000, scoped, tag = 'input window, operand 1, single buffered']
    #allocation7 [shape = 's32[1]{0}', space=sflag, size = 0x4, scoped, tag = 'scoped memory for tpu_custom_call.1']
    #allocation8 [shape = 'u8[512]{0}', space=vmem, size = 0x400, scoped, tag = 'input window, operand 4, single buffered']
    #allocation9 [shape = 'u8[8192]{0}', space=vmem, size = 0x2000, scoped, tag = 'output window, operand 0, single buffered']
    %12 = vsyncpa [#allocation4], 0
    %13 = vsyncpa [#allocation7], 0
    %14 = vsyncpa [#allocation5], 0
    // Predicated region
    $region2: #{tpu_custom_call.1} parent=1 // pred_check
      _
    $region3: #{tpu_custom_call.1} parent=1 // pred_check_branch
      %16 = sbr.rel (0) target = $region5
    $region4: #{tpu_custom_call.1} parent=1 // pred_region
      %s18 = ssub.s32 256, 256
      %19 = vsyncadd [#allocation4], %s18
      %s20 = sshll.u32 [#allocation3], 4
      %s21 = int_to_ptr.vmem [resolvable:$true] %s20
      %26 = dma.hbm_to_vmem [thread:$0]  %s0, 256, %s21, [#allocation4], 128, 128, 8
    $region5: #{tpu_custom_call.1} parent=1 // pred_fallthru
      _
    // Predicated region
    $region6: #{tpu_custom_call.1} parent=1 // pred_check
      _
    $region7: #{tpu_custom_call.1} parent=1 // pred_check_branch
      %28 = sbr.rel (0) target = $region9
    $region8: #{tpu_custom_call.1} parent=1 // pred_region
      %s30 = ssub.s32 256, 256
      %31 = vsyncadd [#allocation7], %s30
      %s32 = sshll.u32 [#allocation6], 4
      %s33 = int_to_ptr.vmem [resolvable:$true] %s32
      %38 = dma.hbm_to_vmem [thread:$0]  %s1, 256, %s33, [#allocation7], 64, 64, 4
    $region9: #{tpu_custom_call.1} parent=1 // pred_fallthru
      _
    // Predicated region
    $region10: #{tpu_custom_call.1} parent=1 // pred_check
      _
    $region11: #{tpu_custom_call.1} parent=1 // pred_check_branch
      %40 = sbr.rel (0) target = $region13
    $region12: #{tpu_custom_call.1} parent=1 // pred_region
      _
    $region13: #{tpu_custom_call.1} parent=1 // pred_fallthru
      _
    // Predicated region
    $region14: #{tpu_custom_call.1} parent=1 // pred_check
      _
    $region15: #{tpu_custom_call.1} parent=1 // pred_check_branch
      %42 = sbr.rel (0) target = $region17
    $region16: #{tpu_custom_call.1} parent=1 // pred_region
      _
    $region17: #{tpu_custom_call.1} parent=1 // pred_fallthru
      _
    // Predicated region
    $region18: #{tpu_custom_call.1} parent=1 // pred_check
      _
    $region19: #{tpu_custom_call.1} parent=1 // pred_check_branch
      %44 = sbr.rel (0) target = $region21
    $region20: #{tpu_custom_call.1} parent=1 // pred_region
      %s46 = ssub.s32 16, 16
      %47 = vsyncadd [#allocation7], %s46
      %s49 = sshll.u32 [#allocation8], 4
      %s50 = int_to_ptr.vmem [resolvable:$true] %s49
      %52 = dma.hbm_to_vmem [thread:$0]  %s4, 16, %s50, [#allocation7]
    $region21: #{tpu_custom_call.1} parent=1 // pred_fallthru
      _
    // Predicated region
    $region22: #{tpu_custom_call.1} parent=1 // pred_check
      _
    $region23: #{tpu_custom_call.1} parent=1 // pred_check_branch
      %54 = sbr.rel (0) target = $region25
    $region24: #{tpu_custom_call.1} parent=1 // pred_region
      _
    $region25: #{tpu_custom_call.1} parent=1 // pred_fallthru
      _
    // Predicated region
    $region26: #{tpu_custom_call.1} parent=1 // pred_check
      _
    $region27: #{tpu_custom_call.1} parent=1 // pred_check_branch
      %56 = sbr.rel (0) target = $region29
    $region28: #{tpu_custom_call.1} parent=1 // pred_region
      _
    $region29: #{tpu_custom_call.1} parent=1 // pred_fallthru
      _
    // Predicated region
    $region30: #{tpu_custom_call.1} parent=1 // pred_check
      _
    $region31: #{tpu_custom_call.1} parent=1 // pred_check_branch
      %58 = sbr.rel (0) target = $region33
    $region32: #{tpu_custom_call.1} parent=1 // pred_region
      %59 = dma.done [#allocation4], 256
    $region33: #{tpu_custom_call.1} parent=1 // pred_fallthru
      _
    // Predicated region
    $region34: #{tpu_custom_call.1} parent=1 // pred_check
      _
    $region35: #{tpu_custom_call.1} parent=1 // pred_check_branch
      %61 = sbr.rel (0) target = $region37
    $region36: #{tpu_custom_call.1} parent=1 // pred_region
      %62 = dma.done [#allocation7], 256
    $region37: #{tpu_custom_call.1} parent=1 // pred_fallthru
      _
    // Predicated region
    $region38: #{tpu_custom_call.1} parent=1 // pred_check
      _
    $region39: #{tpu_custom_call.1} parent=1 // pred_check_branch
      %64 = sbr.rel (0) target = $region41
    $region40: #{tpu_custom_call.1} parent=1 // pred_region
      %65 = dma.done [#allocation7], 16
    $region41: #{tpu_custom_call.1} parent=1 // pred_fallthru
      _
    %p67 = scmp.eq.s32.totalorder 0, 0
    // Predicated region
    $region42: #{tpu_custom_call.1} parent=1 // pred_check
      %p68 = pneg %p67
    $region43: #{tpu_custom_call.1} parent=1 // pred_check_branch
      %70 = sbr.rel (%p68) target = $region45
    $region44: #{tpu_custom_call.1} parent=1 // pred_region
      %v71 = vld [vmem:[#allocation3] sm:$0xff]
      %v72 = vld [vmem:[#allocation3 + $0x8] sm:$0xff]
      %v73 = vpack.c.bf16 %v72, %v71
      %v74 = vld [vmem:[#allocation6] sm:$0xf]
      %v75 = vld [vmem:[#allocation6 + $0x4] sm:$0xf]
      %v76 = vld [vmem:[#allocation6 + $0x8] sm:$0xf]
      %v77 = vld [vmem:[#allocation6 + $0xc] sm:$0xf]
      %v78 = vld [vmem:[%s2] sm:$0x1]
      %v80 = vlaneseq
      %v81 = vshrl.u32 %v80, 7
      %v82 = vsub.s32 0, %v81
      %v83 = vrot.slane %v78, %v82
      %v89 = vunpack.c.l.b16 %v74
      %v90 = vunpack.c.l.b16 %v75
      %v91 = vunpack.c.l.b16 %v76
      %v92 = vunpack.c.l.b16 %v77
      %v93 = vpack.c.b16 %v90, %v89
      %v94 = vpack.c.b16 %v92, %v91
      %vm97 = vcmask 261120
      %v99 = vsel %vm97, %v73, 0
      %101 = vmatprep.subr.bf16.mxu0 0
      %102 = vmatpush1.bf16.msra.mxu0 %v93
      %103 = vmatprep.subr.bf16.mxu0 0
      %104 = vmatpush1.bf16.msra.mxu0 %v94
      %105 = vmatprep.subr.bf16.mxu0 0
      %106 = vmatpush1.bf16.msra.mxu0 0
      %107 = vmatprep.subr.bf16.mxu0 0
      %108 = vmatpush1.bf16.msra.mxu0 0
      %109 = vmatprep.subr.bf16.mxu0 0
      %110 = vmatpush1.bf16.msra.mxu0 0
      %111 = vmatprep.subr.bf16.mxu0 0
      %112 = vmatpush1.bf16.msra.mxu0 0
      %113 = vmatprep.subr.bf16.mxu0 0
      %114 = vmatpush1.bf16.msra.mxu0 0
      %115 = vmatprep.subr.bf16.mxu0 0
      %116 = vmatpush1.bf16.msra.mxu0 0
      %117 = vmatprep.subr.bf16.mxu0 0
      %118 = vmatpush1.bf16.msra.mxu0 0
      %119 = vmatprep.subr.bf16.mxu0 0
      %120 = vmatpush1.bf16.msra.mxu0 0
      %121 = vmatprep.subr.bf16.mxu0 0
      %122 = vmatpush1.bf16.msra.mxu0 0
      %123 = vmatprep.subr.bf16.mxu0 0
      %124 = vmatpush1.bf16.msra.mxu0 0
      %125 = vmatprep.subr.bf16.mxu0 0
      %126 = vmatpush1.bf16.msra.mxu0 0
      %127 = vmatprep.subr.bf16.mxu0 0
      %128 = vmatpush1.bf16.msra.mxu0 0
      %129 = vmatprep.subr.bf16.mxu0 0
      %130 = vmatpush1.bf16.msra.mxu0 0
      %131 = vmatprep.subr.bf16.mxu0 0
      %132 = vmatpush1.bf16.msra.mxu0 0
      %133 = vmatprep.mubr.bf16.mxu0 0
      %134 = vmatmul.mubr.bf16.gmra.mrb[0].mxu0 %v99
      %v135 = vpop.f32.mrb[0].mxu0
      %v136 = vadd.f32 %v83, %v135
      %v137 = vpop.f32.mrb[0].mxu0
      %v138 = vpop.f32.mrb[0].mxu0
      %v139 = vadd.f32 %v83, %v138
      %v140 = vpop.f32.mrb[0].mxu0
      %141 = vdwg.mxu0
      %v142 = vmul.f32 %v136, 0.5
      %v143 = vmul.f32 %v139, 0.5
      %v144 = vmul.f32 %v136, 0.70710677
      %v145 = vmul.f32 %v139, 0.70710677
      %v146 = verf.f32.pop %v144
      %v147 = verf.f32.pop %v145
      %v148 = vadd.f32 %v146, 1.0
      %v149 = vadd.f32 %v147, 1.0
      %v150 = vmul.f32 %v142, %v148
      %v151 = vmul.f32 %v143, %v149
      %v152 = vsel %vm97, %v150, 0.0
      %153 = vadd.xlane.f32.xlu0 %v152
      %v154 = vpop.xlane.xlu0 %153
      %v155 = vsel %vm97, %v151, 0.0
      %156 = vadd.xlane.f32.xlu0 %v155
      %v157 = vpop.xlane.xlu0 %156
      %v158 = vrcp.pop 32.0
      %v159 = vmul.f32 %v154, %v158
      %v160 = vmul.f32 %v157, %v158
      %v161 = vsub.f32 %v150, %v159
      %v162 = vsub.f32 %v151, %v160
      %v163 = vmul.f32 %v161, %v161
      %v164 = vmul.f32 %v162, %v162
      %v165 = vsel %vm97, %v163, 0.0
      %166 = vadd.xlane.f32.xlu0 %v165
      %v167 = vpop.xlane.xlu0 %166
      %v168 = vsel %vm97, %v164, 0.0
      %169 = vadd.xlane.f32.xlu0 %v168
      %v170 = vpop.xlane.xlu0 %169
      %v171 = vmul.f32 %v167, %v158
      %v172 = vmul.f32 %v170, %v158
      %v173 = vadd.f32 %v171, 1e-12
      %v174 = vadd.f32 %v172, 1e-12
      %v175 = vrsqrt.pop %v173
      %v176 = vrsqrt.pop %v174
      %v177 = vmul.f32 %v161, %v175
      %v178 = vmul.f32 %v162, %v176
      %v179 = vld [vmem:[%s3] sm:$0x1]
      %v181 = vlaneseq
      %v182 = vshrl.u32 %v181, 7
      %v183 = vsub.s32 0, %v182
      %v184 = vrot.slane %v179, %v183
      %v186 = vmul.f32 %v177, %v184
      %v187 = vmul.f32 %v178, %v184
      %v188 = vld [vmem:[#allocation8] sm:$0x1]
      %v190 = vlaneseq
      %v191 = vshrl.u32 %v190, 7
      %v192 = vsub.s32 0, %v191
      %v193 = vrot.slane %v188, %v192
      %v195 = vadd.f32 %v186, %v193
      %v196 = vadd.f32 %v187, %v193
      %v197 = vpack.c.bf16 %v196, %v195
      %198 = vst.msk [vmem:[#allocation2] sm:$0xff] %vm97, %v197
    $region45: #{tpu_custom_call.1} parent=1 // pred_fallthru
      _
    %v199 = vld [vmem:[#allocation2] sm:$0xff]
    %v200 = vld [vmem:[%s5] sm:$0xf]
    %v201 = vld [vmem:[%s5 + $0x4] sm:$0xf]
    %v202 = vld [vmem:[%s5 + $0x8] sm:$0xf]
    %v203 = vld [vmem:[%s5 + $0xc] sm:$0xf]
    %v204 = vld [vmem:[%s6] sm:$0x1]
    %v206 = vlaneseq
    %v207 = vshrl.u32 %v206, 7
    %v208 = vsub.s32 0, %v207
    %v209 = vrot.slane %v204, %v208
    %v215 = vunpack.c.l.b16 %v200
    %v216 = vunpack.c.l.b16 %v201
    %v217 = vunpack.c.l.b16 %v202
    %v218 = vunpack.c.l.b16 %v203
    %v219 = vpack.c.b16 %v216, %v215
    %v220 = vpack.c.b16 %v218, %v217
    %vm223 = vcmask 261120
    %v225 = vsel %vm223, %v199, 0
    %227 = vmatprep.subr.bf16.mxu0 0
    %228 = vmatpush1.bf16.msra.mxu0 %v219
    %229 = vmatprep.subr.bf16.mxu0 0
    %230 = vmatpush1.bf16.msra.mxu0 %v220
    %231 = vmatprep.subr.bf16.mxu0 0
    %232 = vmatpush1.bf16.msra.mxu0 0
    %233 = vmatprep.subr.bf16.mxu0 0
    %234 = vmatpush1.bf16.msra.mxu0 0
    %235 = vmatprep.subr.bf16.mxu0 0
    %236 = vmatpush1.bf16.msra.mxu0 0
    %237 = vmatprep.subr.bf16.mxu0 0
    %238 = vmatpush1.bf16.msra.mxu0 0
    %239 = vmatprep.subr.bf16.mxu0 0
    %240 = vmatpush1.bf16.msra.mxu0 0
    %241 = vmatprep.subr.bf16.mxu0 0
    %242 = vmatpush1.bf16.msra.mxu0 0
    %243 = vmatprep.subr.bf16.mxu0 0
    %244 = vmatpush1.bf16.msra.mxu0 0
    %245 = vmatprep.subr.bf16.mxu0 0
    %246 = vmatpush1.bf16.msra.mxu0 0
    %247 = vmatprep.subr.bf16.mxu0 0
    %248 = vmatpush1.bf16.msra.mxu0 0
    %249 = vmatprep.subr.bf16.mxu0 0
    %250 = vmatpush1.bf16.msra.mxu0 0
    %251 = vmatprep.subr.bf16.mxu0 0
    %252 = vmatpush1.bf16.msra.mxu0 0
    %253 = vmatprep.subr.bf16.mxu0 0
    %254 = vmatpush1.bf16.msra.mxu0 0
    %255 = vmatprep.subr.bf16.mxu0 0
    %256 = vmatpush1.bf16.msra.mxu0 0
    %257 = vmatprep.subr.bf16.mxu0 0
    %258 = vmatpush1.bf16.msra.mxu0 0
    %259 = vmatprep.mubr.bf16.mxu0 0
    %260 = vmatmul.mubr.bf16.gmra.mrb[0].mxu0 %v225
    %v261 = vpop.f32.mrb[0].mxu0
    %v262 = vadd.f32 %v209, %v261
    %v263 = vpop.f32.mrb[0].mxu0
    %v264 = vpop.f32.mrb[0].mxu0
    %v265 = vadd.f32 %v209, %v264
    %v266 = vpop.f32.mrb[0].mxu0
    %267 = vdwg.mxu0
    %268 = vst [vmem:[#allocation9] sm:$0xff] %v262
    %269 = vst [vmem:[#allocation9 + $0x8] sm:$0xff] %v265
    // Predicated region
    $region46: #{tpu_custom_call.1} parent=1 // pred_check
      _
    $region47: #{tpu_custom_call.1} parent=1 // pred_check_branch
      %271 = sbr.rel (0) target = $region49
    $region48: #{tpu_custom_call.1} parent=1 // pred_region
      %s273 = ssub.s32 256, 256
      %274 = vsyncadd [#allocation5], %s273
      %s275 = sshll.u32 [#allocation9], 4
      %s276 = int_to_ptr.vmem [resolvable:$true] %s275
      %281 = dma.vmem_to_hbm [thread:$0]  %s276, 256, %s7, [#allocation5], 128, 128, 8
    $region49: #{tpu_custom_call.1} parent=1 // pred_fallthru
      _
    // Predicated region
    $region50: #{tpu_custom_call.1} parent=1 // pred_check
      _
    $region51: #{tpu_custom_call.1} parent=1 // pred_check_branch
      %283 = sbr.rel (0) target = $region53
    $region52: #{tpu_custom_call.1} parent=1 // pred_region
      %284 = dma.done [#allocation5], 256
    $region53: #{tpu_custom_call.1} parent=1 // pred_fallthru
      _
    %285 = vsyncpa [#allocation4], 1
    %286 = vsyncpa [#allocation7], 1
    %287 = vsyncpa [#allocation5], 1

</llo_original>
